<compile_context>
chip_gen: v7x
topology: tpu7x:2x2x1
jax: 0.10.0
libtpu: 0.0.40
codegen_flags: <defaults>
</compile_context>

<pallas_src>
import math

import jax
import jax.numpy as jnp
from jax.experimental import pallas as pl
from jax.experimental.pallas import tpu as pltpu


def _round_up(a, m):
    return (a + m - 1) // m * m


def _slp_kernel(x_ref, w1_ref, b1_ref, w2_ref, b2_ref, o_ref):
    # x_ref:  (tb, in_dim)        f32  (cast to bf16 in-kernel; no wrapper copy)
    # w1_ref: (in_dim, hid_pad)   bf16 (VMEM-resident, constant index map)
    # b1_ref: (1, hid_pad)        f32
    # w2_ref: (hid_pad, out_pad)  bf16
    # b2_ref: (1, out_pad)        f32
    # o_ref:  (tb, out_pad)       f32  (narrow output -> tiny HBM writeback)
    x = x_ref[...].astype(jnp.bfloat16)

    # Layer 1: Linear + ReLU (bf16 MXU operands, f32 accumulation/elementwise).
    h = jnp.dot(x, w1_ref[...], preferred_element_type=jnp.float32)
    h = jnp.maximum(h + b1_ref[...], 0.0)

    # Output layer: Linear.
    logits = jnp.dot(h.astype(jnp.bfloat16), w2_ref[...],
                     preferred_element_type=jnp.float32)
    o_ref[...] = logits + b2_ref[...]


def prepare_params(params):
    """One-time packing: pad / cast weights outside the per-call hot path.

    params: dict with w1 [in, hidden], b1 [hidden], w2 [hidden, out], b2 [out]
            (weights stored [in, out], i.e. already transposed vs. torch).
    """
    in_dim, hidden = params["w1"].shape
    out_dim = params["w2"].shape[1]
    hid_pad = _round_up(hidden, 128)        # lane-dense hidden activations
    out_pad = _round_up(out_dim, 8)         # narrow but sublane-aligned output

    w1 = jnp.zeros((in_dim, hid_pad), jnp.bfloat16)
    w1 = w1.at[:, :hidden].set(params["w1"].astype(jnp.bfloat16))
    b1 = jnp.zeros((1, hid_pad), jnp.float32).at[0, :hidden].set(params["b1"])

    w2 = jnp.zeros((hid_pad, out_pad), jnp.bfloat16)
    w2 = w2.at[:hidden, :out_dim].set(params["w2"].astype(jnp.bfloat16))
    b2 = jnp.zeros((1, out_pad), jnp.float32).at[0, :out_dim].set(params["b2"])

    return {"w1": w1, "b1": b1, "w2": w2, "b2": b2,
            "in_dim": in_dim, "out_dim": out_dim}


def slp_forward(x, packed, *, tb_max=2048):
    """Fused SLP forward.  x: [batch, input_dim] float32; packed: prepare_params()."""
    batch, in_dim = x.shape
    assert in_dim == packed["in_dim"]
    out_dim = packed["out_dim"]
    hid_pad = packed["w1"].shape[1]
    out_pad = packed["w2"].shape[1]

    # --- batch tiling --------------------------------------------------------
    batch8 = _round_up(batch, 8)
    if batch8 <= 256:
        tb = batch8                                   # tiny batch: single step
    else:
        # >=2 grid steps so v7x's second TensorCore gets work; cap tile size so
        # double-buffered x/out tiles stay well inside scoped VMEM everywhere.
        tb = min(tb_max, _round_up(-(-batch8 // 2), 8))
    padded_batch = _round_up(batch8, tb)

    x = x.astype(jnp.float32)
    if padded_batch != batch:
        # Row-pad only when needed (no dtype/lane padding pass over x).
        x = jnp.pad(x, ((0, padded_batch - batch), (0, 0)))

    grid = (padded_batch // tb,)

    out = pl.pallas_call(
        _slp_kernel,
        out_shape=jax.ShapeDtypeStruct((padded_batch, out_pad), jnp.float32),
        grid_spec=pltpu.PrefetchScalarGridSpec(
            num_scalar_prefetch=0,
            grid=grid,
            in_specs=[
                pl.BlockSpec((tb, in_dim), lambda i: (i, 0)),        # x tile
                pl.BlockSpec((in_dim, hid_pad), lambda i: (0, 0)),   # W1
                pl.BlockSpec((1, hid_pad), lambda i: (0, 0)),        # b1
                pl.BlockSpec((hid_pad, out_pad), lambda i: (0, 0)),  # W2
                pl.BlockSpec((1, out_pad), lambda i: (0, 0)),        # b2
            ],
            out_specs=pl.BlockSpec((tb, out_pad), lambda i: (i, 0)),
        ),
        compiler_params=pltpu.CompilerParams(
            dimension_semantics=("parallel",),
            vmem_limit_bytes=32 * 1024 * 1024),
    )(x, packed["w1"], packed["b1"], packed["w2"], packed["b2"])

    return out[:batch, :out_dim]


def init_params(key, input_dim, hidden, out_dim):
    """PyTorch-default (uniform fan-in) init; weights stored [in, out]."""
    ks = jax.random.split(key, 4)

    def linear(kw, kb, fan_in, fan_out):
        bound = 1.0 / math.sqrt(float(fan_in))
        w = jax.random.uniform(kw, (fan_in, fan_out), jnp.float32, -bound, bound)
        b = jax.random.uniform(kb, (fan_out,), jnp.float32, -bound, bound)
        return w, b

    w1, b1 = linear(ks[0], ks[1], input_dim, hidden)
    w2, b2 = linear(ks[2], ks[3], hidden, out_dim)
    return {"w1": w1, "b1": b1, "w2": w2, "b2": b2}


def _reference(x, p):
    h = jnp.maximum(x @ p["w1"] + p["b1"], 0.0)
    return h @ p["w2"] + p["b2"]


if __name__ == "__main__":
    key = jax.random.PRNGKey(0)
    k_x, k_p = jax.random.split(key)

    # SLP(input_shape=(16,), output_shape=4); hidden_shape fixed at 40.
    batch, input_dim, hidden, n_out = 8, 16, 40, 4
    # TODO(synk): torch.from_numpy(x).float() host conversion is outside kernel
    # scope; inputs are passed directly as jnp arrays.
    x = jax.random.normal(k_x, (batch, input_dim), jnp.float32)
    params = init_params(k_p, input_dim, hidden, n_out)
    packed = prepare_params(params)       # one-time weight packing (hoisted)

    out = slp_forward(x, packed)
    jax.block_until_ready(out)

    ref = _reference(x, params)
    assert out.shape == (batch, n_out)
    # bf16 MXU operands with f32 accumulation -> bf16-level tolerance.
    assert jnp.allclose(out, ref, atol=5e-2, rtol=5e-2), "mismatch vs. reference"

    print("KERNEL_OK")
</pallas_src>

<mosaic_0001>
module attributes {stable_mosaic.version = 11 : i64} {
  func.func @_slp_kernel(%arg0: i32, %arg1: memref<8x16xf32, #tpu.memory_space<vmem>>, %arg2: memref<16x128xbf16, #tpu.memory_space<vmem>>, %arg3: memref<1x128xf32, #tpu.memory_space<vmem>>, %arg4: memref<128x8xbf16, #tpu.memory_space<vmem>>, %arg5: memref<1x8xf32, #tpu.memory_space<vmem>>, %arg6: memref<8x8xf32, #tpu.memory_space<vmem>>) attributes {dimension_semantics = [#tpu.dimension_semantics<parallel>], iteration_bounds = array<i64: 1>, scalar_prefetch = 0 : i64, scratch_operands = 0 : i64, tpu.core_type = #tpu.core_type<tc>, window_params = [{transform_indices = @transform_0, window_bounds = array<i64: 8, 16>}, {pipeline_mode = #tpu.pipeline_mode<synchronous>, transform_indices = @transform_1, window_bounds = array<i64: 16, 128>}, {pipeline_mode = #tpu.pipeline_mode<synchronous>, transform_indices = @transform_2, window_bounds = array<i64: 1, 128>}, {pipeline_mode = #tpu.pipeline_mode<synchronous>, transform_indices = @transform_3, window_bounds = array<i64: 128, 8>}, {pipeline_mode = #tpu.pipeline_mode<synchronous>, transform_indices = @transform_4, window_bounds = array<i64: 1, 8>}, {transform_indices = @transform_5, window_bounds = array<i64: 8, 8>}]} {
    %c0 = arith.constant 0 : index
    %c0_0 = arith.constant 0 : index
    %0 = vector.load %arg1[%c0, %c0_0] : memref<8x16xf32, #tpu.memory_space<vmem>>, vector<8x16xf32>
    %1 = arith.truncf %0 : vector<8x16xf32> to vector<8x16xbf16>
    %c0_1 = arith.constant 0 : index
    %c0_2 = arith.constant 0 : index
    %2 = vector.load %arg2[%c0_1, %c0_2] : memref<16x128xbf16, #tpu.memory_space<vmem>>, vector<16x128xbf16>
    %cst = arith.constant dense<0.000000e+00> : vector<8x128xf32>
    %3 = tpu.matmul %1, %2, %cst {dimension_numbers = #tpu.dot_dimension_numbers<[1], [0], [0], [1], [0, 0, 1, 1], [], []>} : vector<8x16xbf16>, vector<16x128xbf16>, vector<8x128xf32> -> vector<8x128xf32>
    %c0_3 = arith.constant 0 : index
    %c0_4 = arith.constant 0 : index
    %4 = vector.load %arg3[%c0_3, %c0_4] : memref<1x128xf32, #tpu.memory_space<vmem>>, vector<1x128xf32>
    %5 = vector.broadcast %4 : vector<1x128xf32> to vector<8x128xf32>
    %6 = arith.addf %3, %5 : vector<8x128xf32>
    %cst_5 = arith.constant 0.000000e+00 : f32
    %7 = vector.broadcast %cst_5 : f32 to vector<8x128xf32>
    %8 = arith.maximumf %6, %7 : vector<8x128xf32>
    %9 = arith.truncf %8 : vector<8x128xf32> to vector<8x128xbf16>
    %c0_6 = arith.constant 0 : index
    %c0_7 = arith.constant 0 : index
    %10 = vector.load %arg4[%c0_6, %c0_7] : memref<128x8xbf16, #tpu.memory_space<vmem>>, vector<128x8xbf16>
    %cst_8 = arith.constant dense<0.000000e+00> : vector<8x8xf32>
    %11 = tpu.matmul %9, %10, %cst_8 {dimension_numbers = #tpu.dot_dimension_numbers<[1], [0], [0], [1], [0, 0, 1, 1], [], []>} : vector<8x128xbf16>, vector<128x8xbf16>, vector<8x8xf32> -> vector<8x8xf32>
    %c0_9 = arith.constant 0 : index
    %c0_10 = arith.constant 0 : index
    %12 = vector.load %arg5[%c0_9, %c0_10] : memref<1x8xf32, #tpu.memory_space<vmem>>, vector<1x8xf32>
    %13 = vector.broadcast %12 : vector<1x8xf32> to vector<8x8xf32>
    %14 = arith.addf %11, %13 : vector<8x8xf32>
    %c0_11 = arith.constant 0 : index
    %c0_12 = arith.constant 0 : index
    %15 = vector.load %arg6[%c0_11, %c0_12] : memref<8x8xf32, #tpu.memory_space<vmem>>, vector<8x8xf32>
    tpu.vector_store %arg6[%c0_11, %c0_12], %14 {strides = array<i32>} : memref<8x8xf32, #tpu.memory_space<vmem>>, vector<8x8xf32>,
    return
  }
  func.func @transform_0(%arg0: i32) -> (i32, i32) {
    %c0_i32 = arith.constant 0 : i32
    %c0_i32_0 = arith.constant 0 : i32
    return %arg0, %c0_i32 : i32, i32
  }
  func.func @transform_1(%arg0: i32) -> (i32, i32) {
    %c0_i32 = arith.constant 0 : i32
    %c0_i32_0 = arith.constant 0 : i32
    %c0_i32_1 = arith.constant 0 : i32
    return %c0_i32, %c0_i32_0 : i32, i32
  }
  func.func @transform_2(%arg0: i32) -> (i32, i32) {
    %c0_i32 = arith.constant 0 : i32
    %c0_i32_0 = arith.constant 0 : i32
    %c0_i32_1 = arith.constant 0 : i32
    return %c0_i32, %c0_i32_0 : i32, i32
  }
  func.func @transform_3(%arg0: i32) -> (i32, i32) {
    %c0_i32 = arith.constant 0 : i32
    %c0_i32_0 = arith.constant 0 : i32
    %c0_i32_1 = arith.constant 0 : i32
    return %c0_i32, %c0_i32_0 : i32, i32
  }
  func.func @transform_4(%arg0: i32) -> (i32, i32) {
    %c0_i32 = arith.constant 0 : i32
    %c0_i32_0 = arith.constant 0 : i32
    %c0_i32_1 = arith.constant 0 : i32
    return %c0_i32, %c0_i32_0 : i32, i32
  }
  func.func @transform_5(%arg0: i32) -> (i32, i32) {
    %c0_i32 = arith.constant 0 : i32
    %c0_i32_0 = arith.constant 0 : i32
    return %arg0, %c0_i32 : i32, i32
  }
}

</mosaic_0001>

<llo_original>
// kernel: tpu_custom_call.1
$region0: #{tpu_custom_call.1}
  #allocation0 [shape = 'u32[]', space=smem, size = 0x4, offset = 0x4, fixed_abs, tag = 'smem constant byte address 0x4 - core index']
  #allocation1 [shape = 'u32[144,128]{1,0:T(1,128)}', space=vmem, size = 0x12000, scoped, tag = 'internal scratch']
  %s0 = inlined_call_operand.vmem [shape: f32[8,16], index: 0, kind: input, shape index: {}]
  %s1 = inlined_call_operand.vmem [shape: bf16[16,128], index: 1, kind: input, shape index: {}]
  %s2 = inlined_call_operand.vmem [shape: f32[1,128], index: 2, kind: input, shape index: {}]
  %s3 = inlined_call_operand.vmem [shape: bf16[128,8], index: 3, kind: input, shape index: {}]
  %s4 = inlined_call_operand.vmem [shape: f32[1,8], index: 4, kind: input, shape index: {}]
  %s5 = inlined_call_operand.hbm [shape: f32[8,8], index: 5, kind: output, shape index: {}]
  %s6 = sld [smem:[#allocation0]]
  $region30: #{tpu_custom_call.1} parent=0
    _
  %s8 = ssub.s32 1, %s6
  %s9 = scalar_select 0, %s8, %s6
  $region1: #{tpu_custom_call.1} parent=0
    #allocation2 [shape = 'u8[4096]{0}', space=vmem, size = 0x1000, scoped, tag = 'output window, operand 0, single buffered']
    #allocation3 [shape = 's32[1]{0}', space=sflag, size = 0x4, scoped, tag = 'scoped memory for tpu_custom_call.1']
    %10 = vsyncpa [#allocation3], 0
    // Predicated region
    $region2: #{tpu_custom_call.1} parent=1 // pred_check
      _
    $region3: #{tpu_custom_call.1} parent=1 // pred_check_branch
      %12 = sbr.rel (0) target = $region5
    $region4: #{tpu_custom_call.1} parent=1 // pred_region
      _
    $region5: #{tpu_custom_call.1} parent=1 // pred_fallthru
      _
    // Predicated region
    $region6: #{tpu_custom_call.1} parent=1 // pred_check
      _
    $region7: #{tpu_custom_call.1} parent=1 // pred_check_branch
      %14 = sbr.rel (0) target = $region9
    $region8: #{tpu_custom_call.1} parent=1 // pred_region
      _
    $region9: #{tpu_custom_call.1} parent=1 // pred_fallthru
      _
    // Predicated region
    $region10: #{tpu_custom_call.1} parent=1 // pred_check
      _
    $region11: #{tpu_custom_call.1} parent=1 // pred_check_branch
      %16 = sbr.rel (0) target = $region13
    $region12: #{tpu_custom_call.1} parent=1 // pred_region
      _
    $region13: #{tpu_custom_call.1} parent=1 // pred_fallthru
      _
    // Predicated region
    $region14: #{tpu_custom_call.1} parent=1 // pred_check
      _
    $region15: #{tpu_custom_call.1} parent=1 // pred_check_branch
      %18 = sbr.rel (0) target = $region17
    $region16: #{tpu_custom_call.1} parent=1 // pred_region
      _
    $region17: #{tpu_custom_call.1} parent=1 // pred_fallthru
      _
    // Predicated region
    $region18: #{tpu_custom_call.1} parent=1 // pred_check
      _
    $region19: #{tpu_custom_call.1} parent=1 // pred_check_branch
      %20 = sbr.rel (0) target = $region21
    $region20: #{tpu_custom_call.1} parent=1 // pred_region
      _
    $region21: #{tpu_custom_call.1} parent=1 // pred_fallthru
      _
    %v22 = vld [vmem:[%s0] sm:$0xff]
    %v23 = vpack.c.bf16 %v22, %v22
    %v24 = vld [vmem:[%s1] sm:$0xf]
    %v25 = vld [vmem:[%s1 + $0x4] sm:$0xf]
    %v26 = vld [vmem:[%s2] sm:$0x1]
    %v28 = vlaneseq
    %v29 = vshrl.u32 %v28, 7
    %v30 = vsub.s32 0, %v29
    %v31 = vrot.slane %v26, %v30
    %v35 = vunpack.c.l.b16 %v24
    %v36 = vunpack.c.l.b16 %v25
    %v37 = vpack.c.b16 %v36, %v35
    %vm39 = vcmask 130048
    %v41 = vsel %vm39, %v23, 0
    %43 = vmatprep.subr.bf16.mxu0 0
    %44 = vmatpush1.bf16.msra.mxu0 %v37
    %45 = vmatprep.subr.bf16.mxu0 0
    %46 = vmatpush1.bf16.msra.mxu0 0
    %47 = vmatprep.subr.bf16.mxu0 0
    %48 = vmatpush1.bf16.msra.mxu0 0
    %49 = vmatprep.subr.bf16.mxu0 0
    %50 = vmatpush1.bf16.msra.mxu0 0
    %51 = vmatprep.subr.bf16.mxu0 0
    %52 = vmatpush1.bf16.msra.mxu0 0
    %53 = vmatprep.subr.bf16.mxu0 0
    %54 = vmatpush1.bf16.msra.mxu0 0
    %55 = vmatprep.subr.bf16.mxu0 0
    %56 = vmatpush1.bf16.msra.mxu0 0
    %57 = vmatprep.subr.bf16.mxu0 0
    %58 = vmatpush1.bf16.msra.mxu0 0
    %59 = vmatprep.subr.bf16.mxu0 0
    %60 = vmatpush1.bf16.msra.mxu0 0
    %61 = vmatprep.subr.bf16.mxu0 0
    %62 = vmatpush1.bf16.msra.mxu0 0
    %63 = vmatprep.subr.bf16.mxu0 0
    %64 = vmatpush1.bf16.msra.mxu0 0
    %65 = vmatprep.subr.bf16.mxu0 0
    %66 = vmatpush1.bf16.msra.mxu0 0
    %67 = vmatprep.subr.bf16.mxu0 0
    %68 = vmatpush1.bf16.msra.mxu0 0
    %69 = vmatprep.subr.bf16.mxu0 0
    %70 = vmatpush1.bf16.msra.mxu0 0
    %71 = vmatprep.subr.bf16.mxu0 0
    %72 = vmatpush1.bf16.msra.mxu0 0
    %73 = vmatprep.subr.bf16.mxu0 0
    %74 = vmatpush1.bf16.msra.mxu0 0
    %75 = vmatprep.mubr.bf16.mxu0 0
    %76 = vmatmul.mubr.bf16.gmra.mrb[0].mxu0 %v41
    %v77 = vpop.f32.mrb[0].mxu0
    %v78 = vadd.f32 %v31, %v77
    %v79 = vpop.f32.mrb[0].mxu0
    %v80 = vpop.f32.mrb[0].mxu0
    %v81 = vpop.f32.mrb[0].mxu0
    %82 = vdwg.mxu0
    %v83 = vmax.f32 %v78, 0.0
    %v84 = vpack.c.bf16 %v83, %v83
    %v85 = vld [vmem:[%s3] sm:$0xf]
    %v86 = vld [vmem:[%s3 + $0x4] sm:$0xf]
    %v87 = vld [vmem:[%s3 + $0x8] sm:$0xf]
    %v88 = vld [vmem:[%s3 + $0xc] sm:$0xf]
    %v89 = vld [vmem:[%s3 + $0x10] sm:$0xf]
    %v90 = vld [vmem:[%s3 + $0x14] sm:$0xf]
    %v91 = vld [vmem:[%s3 + $0x18] sm:$0xf]
    %v92 = vld [vmem:[%s3 + $0x1c] sm:$0xf]
    %v93 = vld [vmem:[%s3 + $0x20] sm:$0xf]
    %v94 = vld [vmem:[%s3 + $0x24] sm:$0xf]
    %v95 = vld [vmem:[%s3 + $0x28] sm:$0xf]
    %v96 = vld [vmem:[%s3 + $0x2c] sm:$0xf]
    %v97 = vld [vmem:[%s3 + $0x30] sm:$0xf]
    %v98 = vld [vmem:[%s3 + $0x34] sm:$0xf]
    %v99 = vld [vmem:[%s3 + $0x38] sm:$0xf]
    %v100 = vld [vmem:[%s3 + $0x3c] sm:$0xf]
    %v101 = vld [vmem:[%s4] sm:$0x1]
    %v103 = vlaneseq
    %v104 = vshrl.u32 %v103, 7
    %v105 = vsub.s32 0, %v104
    %v106 = vrot.slane %v101, %v105
    %v124 = vunpack.c.l.b16 %v85
    %v125 = vunpack.c.l.b16 %v86
    %v126 = vunpack.c.l.b16 %v87
    %v127 = vunpack.c.l.b16 %v88
    %v128 = vunpack.c.l.b16 %v89
    %v129 = vunpack.c.l.b16 %v90
    %v130 = vunpack.c.l.b16 %v91
    %v131 = vunpack.c.l.b16 %v92
    %v132 = vunpack.c.l.b16 %v93
    %v133 = vunpack.c.l.b16 %v94
    %v134 = vunpack.c.l.b16 %v95
    %v135 = vunpack.c.l.b16 %v96
    %v136 = vunpack.c.l.b16 %v97
    %v137 = vunpack.c.l.b16 %v98
    %v138 = vunpack.c.l.b16 %v99
    %v139 = vunpack.c.l.b16 %v100
    %v140 = vpack.c.b16 %v125, %v124
    %v141 = vpack.c.b16 %v127, %v126
    %v142 = vpack.c.b16 %v129, %v128
    %v143 = vpack.c.b16 %v131, %v130
    %v144 = vpack.c.b16 %v133, %v132
    %v145 = vpack.c.b16 %v135, %v134
    %v146 = vpack.c.b16 %v137, %v136
    %v147 = vpack.c.b16 %v139, %v138
    %156 = vmatprep.subr.bf16.mxu0 0
    %157 = vmatpush1.bf16.msra.mxu0 %v140
    %158 = vmatprep.subr.bf16.mxu0 0
    %159 = vmatpush1.bf16.msra.mxu0 %v141
    %160 = vmatprep.subr.bf16.mxu0 0
    %161 = vmatpush1.bf16.msra.mxu0 %v142
    %162 = vmatprep.subr.bf16.mxu0 0
    %163 = vmatpush1.bf16.msra.mxu0 %v143
    %164 = vmatprep.subr.bf16.mxu0 0
    %165 = vmatpush1.bf16.msra.mxu0 %v144
    %166 = vmatprep.subr.bf16.mxu0 0
    %167 = vmatpush1.bf16.msra.mxu0 %v145
    %168 = vmatprep.subr.bf16.mxu0 0
    %169 = vmatpush1.bf16.msra.mxu0 %v146
    %170 = vmatprep.subr.bf16.mxu0 0
    %171 = vmatpush1.bf16.msra.mxu0 %v147
    %172 = vmatprep.subr.bf16.mxu0 0
    %173 = vmatpush1.bf16.msra.mxu0 0
    %174 = vmatprep.subr.bf16.mxu0 0
    %175 = vmatpush1.bf16.msra.mxu0 0
    %176 = vmatprep.subr.bf16.mxu0 0
    %177 = vmatpush1.bf16.msra.mxu0 0
    %178 = vmatprep.subr.bf16.mxu0 0
    %179 = vmatpush1.bf16.msra.mxu0 0
    %180 = vmatprep.subr.bf16.mxu0 0
    %181 = vmatpush1.bf16.msra.mxu0 0
    %182 = vmatprep.subr.bf16.mxu0 0
    %183 = vmatpush1.bf16.msra.mxu0 0
    %184 = vmatprep.subr.bf16.mxu0 0
    %185 = vmatpush1.bf16.msra.mxu0 0
    %186 = vmatprep.subr.bf16.mxu0 0
    %187 = vmatpush1.bf16.msra.mxu0 0
    %188 = vmatprep.mubr.bf16.mxu0 0
    %189 = vmatmul.mubr.bf16.gmra.mrb[0].mxu0 %v84
    %v190 = vpop.f32.mrb[0].mxu0
    %v191 = vadd.f32 %v106, %v190
    %v192 = vpop.f32.mrb[0].mxu0
    %v193 = vpop.f32.mrb[0].mxu0
    %v194 = vpop.f32.mrb[0].mxu0
    %195 = vdwg.mxu0
    %vm196 = vcmask 64512
    %197 = vst.msk [vmem:[#allocation2] sm:$0xff] %vm196, %v191
    // Predicated region
    $region22: #{tpu_custom_call.1} parent=1 // pred_check
      _
    $region23: #{tpu_custom_call.1} parent=1 // pred_check_branch
      %199 = sbr.rel (0) target = $region25
    $region24: #{tpu_custom_call.1} parent=1 // pred_region
      %s201 = ssub.s32 128, 128
      %202 = vsyncadd [#allocation3], %s201
      %s204 = sshll.u32 [#allocation2], 4
      %s205 = int_to_ptr.vmem [resolvable:$true] %s204
      %207 = dma.vmem_to_hbm [thread:$0]  %s205, 128, %s5, [#allocation3]
    $region25: #{tpu_custom_call.1} parent=1 // pred_fallthru
      _
    // Predicated region
    $region26: #{tpu_custom_call.1} parent=1 // pred_check
      _
    $region27: #{tpu_custom_call.1} parent=1 // pred_check_branch
      %209 = sbr.rel (0) target = $region29
    $region28: #{tpu_custom_call.1} parent=1 // pred_region
      %210 = dma.done [#allocation3], 128
    $region29: #{tpu_custom_call.1} parent=1 // pred_fallthru
      _
    %211 = vsyncpa [#allocation3], 1

</llo_original>
